<compile_context>
chip_gen: v5e
topology: v5e:2x2
jax: 0.10.0
libtpu: 0.0.40
codegen_flags: <defaults>
</compile_context>

<pallas_src>
import functools

import jax
import jax.numpy as jnp
from jax.experimental import pallas as pl
from jax.experimental.pallas import tpu as pltpu

EPS = 1e-5


def _round_up(v, m):
    return (v + m - 1) // m * m


def _vmem_capacity_bytes():
    """Per-TensorCore VMEM capacity; conservative fallback if the query fails."""
    try:
        info = pltpu.get_tpu_info()
        for name in ("vmem_capacity_bytes", "vmem_size_bytes", "vmem_bytes"):
            cap = getattr(info, name, None)
            if cap:
                return int(cap)
    except Exception:
        pass
    return 64 << 20   # v7x per-core size: safe lower bound across generations


def _postnorm_kernel(x_ref, w_ref, p_ref, o_ref, *, inv_d, compute_dtype):
    # x_ref: (TR, D) native dtype   w_ref: (D, D) mxu dtype
    # p_ref: (3, D) f32  rows = [bias, gamma, beta]   o_ref: (TR, D)
    x = x_ref[...]
    if compute_dtype is not None and x.dtype != compute_dtype:
        x = x.astype(compute_dtype)          # MXU feed only; accum stays f32
    w = w_ref[...]
    bias = p_ref[0:1, :]
    gamma = p_ref[1:2, :]
    beta = p_ref[2:3, :]

    # fn(x) = Linear: MXU matmul with f32 accumulation.
    y = jnp.dot(x, w, preferred_element_type=jnp.float32) + bias

    # LayerNorm over the true last dim (no padded lanes).  Center before
    # squaring: avoids the E[y^2]-E[y]^2 cancellation of the one-pass form.
    mean = jnp.sum(y, axis=-1, keepdims=True) * inv_d
    yc = y - mean
    var = jnp.sum(yc * yc, axis=-1, keepdims=True) * inv_d
    rstd = jax.lax.rsqrt(var + EPS)          # EUP slot
    o_ref[...] = (yc * (gamma * rstd) + beta).astype(o_ref.dtype)


def postnorm(x, w_lin, b_lin, gamma, beta, *, tile_r=None, compute_dtype=None):
    """x: (B, N, D).  w_lin: (D_out, D_in) PyTorch Linear layout.  Returns (B, N, D)."""
    B, N, D = x.shape
    rows = B * N
    dtype = x.dtype
    itemsize = jnp.dtype(dtype).itemsize
    mxu_dtype = jnp.dtype(compute_dtype) if compute_dtype is not None else jnp.dtype(dtype)

    # ---- generation-aware VMEM planning -------------------------------------
    cap = _vmem_capacity_bytes()             # 128 MiB v5e/v6e, 64 MiB/TC v7x
    budget = (cap * 11) // 20                # ~55% of per-core VMEM for this call

    row_mult = 8 if itemsize >= 4 else (16 if itemsize == 2 else 32)
    d_lane = max(128, _round_up(D, 128))     # lanes a D-wide tile occupies in VMEM

    def footprint(tr, w_bufs):
        act = tr * d_lane * itemsize
        w_bytes = _round_up(D, 8) * d_lane * jnp.dtype(mxu_dtype).itemsize
        f32_tmp = 4 * tr * d_lane * 4        # y, centered, squared, out (f32)
        return (2 * act + 2 * act            # double-buffered x / out row tiles
                + w_bufs * w_bytes           # resident weight
                + w_bufs * 8 * d_lane * 4    # resident params (padded sublanes)
                + f32_tmp)

    if tile_r is None:
        tile_r = 1024 if cap >= (100 << 20) else 512
    tile_r = max(row_mult,
                 min(_round_up(tile_r, row_mult), _round_up(rows, row_mult)))
    if tile_r > rows:
        tile_r = rows                        # block == full row dim (always legal)
    while tile_r > row_mult and footprint(tile_r, 1) > budget:
        tile_r = max(row_mult, _round_up(tile_r // 2, row_mult))

    # Explicit scoped-VMEM limit; sized so the double-buffered-W fallback path
    # also fits, never below 32 MiB, never above physical capacity.
    vmem_limit = int(min(cap, max(footprint(tile_r, 2) + (16 << 20), 32 << 20)))

    # ---- operands: reshapes only, no HBM-copying pads ------------------------
    x2 = x.reshape(rows, D)
    w_io = w_lin.T.astype(mxu_dtype)                              # (in, out): x @ W
    params = jnp.stack([b_lin, gamma, beta]).astype(jnp.float32)  # (3, D)

    grid = (pl.cdiv(rows, tile_r),)
    kernel = functools.partial(
        _postnorm_kernel, inv_d=1.0 / D,
        compute_dtype=(None if compute_dtype is None else jnp.dtype(compute_dtype)))

    def resident_spec(shape, single_buffer):
        # Constant index_map -> block fetched once; a second buffer is wasted VMEM.
        if single_buffer:
            return pl.BlockSpec(shape, lambda i: (0, 0),
                                pipeline_mode=pl.Buffered(1))
        return pl.BlockSpec(shape, lambda i: (0, 0))

    def build(single_buffer):
        return pl.pallas_call(
            kernel,
            out_shape=jax.ShapeDtypeStruct((rows, D), dtype),
            grid_spec=pltpu.PrefetchScalarGridSpec(
                num_scalar_prefetch=0,
                grid=grid,
                in_specs=[
                    pl.BlockSpec((tile_r, D), lambda i: (i, 0)),   # x row tile
                    resident_spec((D, D), single_buffer),          # W (resident)
                    resident_spec((3, D), single_buffer),          # bias/gamma/beta
                ],
                out_specs=pl.BlockSpec((tile_r, D), lambda i: (i, 0)),
            ),
            compiler_params=pltpu.CompilerParams(
                dimension_semantics=("parallel",),
                vmem_limit_bytes=vmem_limit,
            ),
        )

    try:
        out2 = build(True)(x2, w_io, params)
    except Exception:
        # pl.Buffered(1) single-buffering not supported on this jax build:
        # fall back to default (double-buffered) resident blocks.
        out2 = build(False)(x2, w_io, params)

    return out2.reshape(B, N, D)


def _reference(x, w_lin, b_lin, gamma, beta):
    y = jnp.einsum("bnd,od->bno", x.astype(jnp.float32),
                   w_lin.astype(jnp.float32)) + b_lin
    mean = jnp.mean(y, axis=-1, keepdims=True)
    var = jnp.mean((y - mean) ** 2, axis=-1, keepdims=True)
    yhat = (y - mean) * jax.lax.rsqrt(var + EPS)
    return yhat * gamma + beta


if __name__ == "__main__":
    key = jax.random.PRNGKey(0)
    k_x, k_w, k_b, k_g, k_bt = jax.random.split(key, 5)

    B, N, D = 2, 8, 32  # batch, tokens, hidden dim

    x = jax.random.normal(k_x, (B, N, D), dtype=jnp.float32)
    # fn = Linear(dim, dim); weight in PyTorch (out, in) layout.
    w_lin = jax.random.normal(k_w, (D, D), dtype=jnp.float32) * 0.05
    b_lin = jax.random.normal(k_b, (D,), dtype=jnp.float32) * 0.05
    # LayerNorm affine params (randomized to exercise the broadcast path).
    gamma = 1.0 + 0.1 * jax.random.normal(k_g, (D,), dtype=jnp.float32)
    beta = 0.1 * jax.random.normal(k_bt, (D,), dtype=jnp.float32)

    # tile_r=8 so even this tiny demo exercises the multi-tile (grid > 1) path.
    out = postnorm(x, w_lin, b_lin, gamma, beta, tile_r=8)
    out = jax.block_until_ready(out)

    ref = _reference(x, w_lin, b_lin, gamma, beta)
    tol = 1e-4 if x.dtype == jnp.float32 else 2e-2   # dtype-aware tolerance
    assert out.shape == (B, N, D)
    assert jnp.allclose(out, ref, atol=tol, rtol=tol), "mismatch vs reference"

    print("KERNEL_OK")
</pallas_src>

<mosaic_0001>
module attributes {stable_mosaic.version = 11 : i64} {
  func.func @_postnorm_kernel(%arg0: i32, %arg1: memref<8x32xf32, #tpu.memory_space<vmem>>, %arg2: memref<32x32xf32, #tpu.memory_space<vmem>>, %arg3: memref<3x32xf32, #tpu.memory_space<vmem>>, %arg4: memref<8x32xf32, #tpu.memory_space<vmem>>) attributes {dimension_semantics = [#tpu.dimension_semantics<parallel>], iteration_bounds = array<i64: 2>, scalar_prefetch = 0 : i64, scratch_operands = 0 : i64, tpu.core_type = #tpu.core_type<tc>, window_params = [{transform_indices = @transform_0, window_bounds = array<i64: 8, 32>}, {pipeline_mode = #tpu.pipeline_mode<synchronous>, transform_indices = @transform_1, window_bounds = array<i64: 32, 32>}, {pipeline_mode = #tpu.pipeline_mode<synchronous>, transform_indices = @transform_2, window_bounds = array<i64: 3, 32>}, {transform_indices = @transform_3, window_bounds = array<i64: 8, 32>}]} {
    %c0 = arith.constant 0 : index
    %c0_0 = arith.constant 0 : index
    %0 = vector.load %arg1[%c0, %c0_0] : memref<8x32xf32, #tpu.memory_space<vmem>>, vector<8x32xf32>
    %c0_1 = arith.constant 0 : index
    %c0_2 = arith.constant 0 : index
    %1 = vector.load %arg2[%c0_1, %c0_2] : memref<32x32xf32, #tpu.memory_space<vmem>>, vector<32x32xf32>
    %c0_3 = arith.constant 0 : index
    %c0_4 = arith.constant 0 : index
    %2 = vector.load %arg3[%c0_3, %c0_4] : memref<3x32xf32, #tpu.memory_space<vmem>>, vector<1x32xf32>
    %c1 = arith.constant 1 : index
    %c0_5 = arith.constant 0 : index
    %3 = vector.load %arg3[%c1, %c0_5] : memref<3x32xf32, #tpu.memory_space<vmem>>, vector<1x32xf32>
    %c2 = arith.constant 2 : index
    %c0_6 = arith.constant 0 : index
    %4 = vector.load %arg3[%c2, %c0_6] : memref<3x32xf32, #tpu.memory_space<vmem>>, vector<1x32xf32>
    %cst = arith.constant dense<0.000000e+00> : vector<8x32xf32>
    %5 = tpu.matmul %0, %1, %cst {dimension_numbers = #tpu.dot_dimension_numbers<[1], [0], [0], [1], [0, 0, 1, 1], [], []>} : vector<8x32xf32>, vector<32x32xf32>, vector<8x32xf32> -> vector<8x32xf32>
    %6 = vector.broadcast %2 : vector<1x32xf32> to vector<8x32xf32>
    %7 = arith.addf %5, %6 : vector<8x32xf32>
    %cst_7 = arith.constant dense<0.000000e+00> : vector<8xf32>
    %8 = vector.multi_reduction <add>, %7, %cst_7 [1] : vector<8x32xf32> to vector<8xf32>
    %9 = vector.shape_cast %8 : vector<8xf32> to vector<8x1xf32>
    %cst_8 = arith.constant 3.125000e-02 : f32
    %10 = vector.broadcast %cst_8 : f32 to vector<8x1xf32>
    %11 = arith.mulf %9, %10 : vector<8x1xf32>
    %12 = vector.broadcast %11 : vector<8x1xf32> to vector<8x32xf32>
    %13 = arith.subf %7, %12 : vector<8x32xf32>
    %14 = arith.mulf %13, %13 : vector<8x32xf32>
    %cst_9 = arith.constant dense<0.000000e+00> : vector<8xf32>
    %15 = vector.multi_reduction <add>, %14, %cst_9 [1] : vector<8x32xf32> to vector<8xf32>
    %16 = vector.shape_cast %15 : vector<8xf32> to vector<8x1xf32>
    %cst_10 = arith.constant 3.125000e-02 : f32
    %17 = vector.broadcast %cst_10 : f32 to vector<8x1xf32>
    %18 = arith.mulf %16, %17 : vector<8x1xf32>
    %cst_11 = arith.constant 9.99999974E-6 : f32
    %19 = vector.broadcast %cst_11 : f32 to vector<8x1xf32>
    %20 = arith.addf %18, %19 : vector<8x1xf32>
    %21 = math.rsqrt %20 : vector<8x1xf32>
    %22 = vector.broadcast %3 : vector<1x32xf32> to vector<8x32xf32>
    %23 = vector.broadcast %21 : vector<8x1xf32> to vector<8x32xf32>
    %24 = arith.mulf %22, %23 : vector<8x32xf32>
    %25 = arith.mulf %13, %24 : vector<8x32xf32>
    %26 = vector.broadcast %4 : vector<1x32xf32> to vector<8x32xf32>
    %27 = arith.addf %25, %26 : vector<8x32xf32>
    %c0_12 = arith.constant 0 : index
    %c0_13 = arith.constant 0 : index
    %28 = vector.load %arg4[%c0_12, %c0_13] : memref<8x32xf32, #tpu.memory_space<vmem>>, vector<8x32xf32>
    tpu.vector_store %arg4[%c0_12, %c0_13], %27 {strides = array<i32>} : memref<8x32xf32, #tpu.memory_space<vmem>>, vector<8x32xf32>,
    return
  }
  func.func @transform_0(%arg0: i32) -> (i32, i32) {
    %c0_i32 = arith.constant 0 : i32
    %c0_i32_0 = arith.constant 0 : i32
    return %arg0, %c0_i32 : i32, i32
  }
  func.func @transform_1(%arg0: i32) -> (i32, i32) {
    %c0_i32 = arith.constant 0 : i32
    %c0_i32_0 = arith.constant 0 : i32
    %c0_i32_1 = arith.constant 0 : i32
    return %c0_i32, %c0_i32_0 : i32, i32
  }
  func.func @transform_2(%arg0: i32) -> (i32, i32) {
    %c0_i32 = arith.constant 0 : i32
    %c0_i32_0 = arith.constant 0 : i32
    %c0_i32_1 = arith.constant 0 : i32
    return %c0_i32, %c0_i32_0 : i32, i32
  }
  func.func @transform_3(%arg0: i32) -> (i32, i32) {
    %c0_i32 = arith.constant 0 : i32
    %c0_i32_0 = arith.constant 0 : i32
    return %arg0, %c0_i32 : i32, i32
  }
}

module attributes {stable_mosaic.version = 11 : i64} {
  func.func @_postnorm_kernel(%arg0: i32, %arg1: memref<8x32xf32, #tpu.memory_space<vmem>>, %arg2: memref<32x32xf32, #tpu.memory_space<vmem>>, %arg3: memref<3x32xf32, #tpu.memory_space<vmem>>, %arg4: memref<8x32xf32, #tpu.memory_space<vmem>>) attributes {dimension_semantics = [#tpu.dimension_semantics<parallel>], iteration_bounds = array<i64: 2>, scalar_prefetch = 0 : i64, scratch_operands = 0 : i64, tpu.core_type = #tpu.core_type<tc>, window_params = [{transform_indices = @transform_0, window_bounds = array<i64: 8, 32>}, {pipeline_mode = #tpu.pipeline_mode<synchronous>, transform_indices = @transform_1, window_bounds = array<i64: 32, 32>}, {pipeline_mode = #tpu.pipeline_mode<synchronous>, transform_indices = @transform_2, window_bounds = array<i64: 3, 32>}, {transform_indices = @transform_3, window_bounds = array<i64: 8, 32>}]} {
    %c0 = arith.constant 0 : index
    %c0_0 = arith.constant 0 : index
    %0 = vector.load %arg1[%c0, %c0_0] : memref<8x32xf32, #tpu.memory_space<vmem>>, vector<8x32xf32>
    %c0_1 = arith.constant 0 : index
    %c0_2 = arith.constant 0 : index
    %1 = vector.load %arg2[%c0_1, %c0_2] : memref<32x32xf32, #tpu.memory_space<vmem>>, vector<32x32xf32>
    %c0_3 = arith.constant 0 : index
    %c0_4 = arith.constant 0 : index
    %2 = vector.load %arg3[%c0_3, %c0_4] : memref<3x32xf32, #tpu.memory_space<vmem>>, vector<1x32xf32>
    %c1 = arith.constant 1 : index
    %c0_5 = arith.constant 0 : index
    %3 = vector.load %arg3[%c1, %c0_5] : memref<3x32xf32, #tpu.memory_space<vmem>>, vector<1x32xf32>
    %c2 = arith.constant 2 : index
    %c0_6 = arith.constant 0 : index
    %4 = vector.load %arg3[%c2, %c0_6] : memref<3x32xf32, #tpu.memory_space<vmem>>, vector<1x32xf32>
    %cst = arith.constant dense<0.000000e+00> : vector<8x32xf32>
    %5 = tpu.matmul %0, %1, %cst {dimension_numbers = #tpu.dot_dimension_numbers<[1], [0], [0], [1], [0, 0, 1, 1], [], []>} : vector<8x32xf32>, vector<32x32xf32>, vector<8x32xf32> -> vector<8x32xf32>
    %6 = vector.broadcast %2 : vector<1x32xf32> to vector<8x32xf32>
    %7 = arith.addf %5, %6 : vector<8x32xf32>
    %cst_7 = arith.constant dense<0.000000e+00> : vector<8xf32>
    %8 = vector.multi_reduction <add>, %7, %cst_7 [1] : vector<8x32xf32> to vector<8xf32>
    %9 = vector.shape_cast %8 : vector<8xf32> to vector<8x1xf32>
    %cst_8 = arith.constant 3.125000e-02 : f32
    %10 = vector.broadcast %cst_8 : f32 to vector<8x1xf32>
    %11 = arith.mulf %9, %10 : vector<8x1xf32>
    %12 = vector.broadcast %11 : vector<8x1xf32> to vector<8x32xf32>
    %13 = arith.subf %7, %12 : vector<8x32xf32>
    %14 = arith.mulf %13, %13 : vector<8x32xf32>
    %cst_9 = arith.constant dense<0.000000e+00> : vector<8xf32>
    %15 = vector.multi_reduction <add>, %14, %cst_9 [1] : vector<8x32xf32> to vector<8xf32>
    %16 = vector.shape_cast %15 : vector<8xf32> to vector<8x1xf32>
    %cst_10 = arith.constant 3.125000e-02 : f32
    %17 = vector.broadcast %cst_10 : f32 to vector<8x1xf32>
    %18 = arith.mulf %16, %17 : vector<8x1xf32>
    %cst_11 = arith.constant 9.99999974E-6 : f32
    %19 = vector.broadcast %cst_11 : f32 to vector<8x1xf32>
    %20 = arith.addf %18, %19 : vector<8x1xf32>
    %21 = math.rsqrt %20 : vector<8x1xf32>
    %22 = vector.broadcast %3 : vector<1x32xf32> to vector<8x32xf32>
    %23 = vector.broadcast %21 : vector<8x1xf32> to vector<8x32xf32>
    %24 = arith.mulf %22, %23 : vector<8x32xf32>
    %25 = arith.mulf %13, %24 : vector<8x32xf32>
    %26 = vector.broadcast %4 : vector<1x32xf32> to vector<8x32xf32>
    %27 = arith.addf %25, %26 : vector<8x32xf32>
    %c0_12 = arith.constant 0 : index
    %c0_13 = arith.constant 0 : index
    %28 = vector.load %arg4[%c0_12, %c0_13] : memref<8x32xf32, #tpu.memory_space<vmem>>, vector<8x32xf32>
    tpu.vector_store %arg4[%c0_12, %c0_13], %27 {strides = array<i32>} : memref<8x32xf32, #tpu.memory_space<vmem>>, vector<8x32xf32>,
    return
  }
  func.func @transform_0(%arg0: i32) -> (i32, i32) {
    %c0_i32 = arith.constant 0 : i32
    %c0_i32_0 = arith.constant 0 : i32
    return %arg0, %c0_i32 : i32, i32
  }
  func.func @transform_1(%arg0: i32) -> (i32, i32) {
    %c0_i32 = arith.constant 0 : i32
    %c0_i32_0 = arith.constant 0 : i32
    %c0_i32_1 = arith.constant 0 : i32
    return %c0_i32, %c0_i32_0 : i32, i32
  }
  func.func @transform_2(%arg0: i32) -> (i32, i32) {
    %c0_i32 = arith.constant 0 : i32
    %c0_i32_0 = arith.constant 0 : i32
    %c0_i32_1 = arith.constant 0 : i32
    return %c0_i32, %c0_i32_0 : i32, i32
  }
  func.func @transform_3(%arg0: i32) -> (i32, i32) {
    %c0_i32 = arith.constant 0 : i32
    %c0_i32_0 = arith.constant 0 : i32
    return %arg0, %c0_i32 : i32, i32
  }
}

</mosaic_0001>

<llo_original>
// kernel: tpu_custom_call.1
$region0: #{tpu_custom_call.1}
  #allocation0 [shape = 'u32[]', space=smem, size = 0x4, offset = 0x4, fixed_abs, tag = 'smem constant byte address 0x4 - core index']
  #allocation1 [shape = 'u32[72,128]{1,0:T(1,128)}', space=vmem, size = 0x9000, scoped, tag = 'internal scratch']
  %s0 = inlined_call_operand.hbm [shape: f32[16,32], index: 0, kind: input, shape index: {}]
  %s1 = inlined_call_operand.hbm [shape: f32[32,32], index: 1, kind: input, shape index: {}]
  %s2 = inlined_call_operand.hbm [shape: f32[3,32], index: 2, kind: input, shape index: {}]
  %s3 = inlined_call_operand.hbm [shape: f32[16,32], index: 3, kind: output, shape index: {}]
  %s4 = sld [smem:[#allocation0]]
  $region57: #{tpu_custom_call.1} parent=0
    _
  %s6 = ssub.s32 1, %s4
  %s7 = scalar_select 0, %s6, %s4
  $region1: #{tpu_custom_call.1} parent=0
    #allocation2 [shape = 'u8[8192]{0}', space=vmem, size = 0x2000, scoped, tag = 'input window, operand 0']
    #allocation3 [shape = 's32[2]{0}', space=sflag, size = 0x8, scoped, tag = 'scoped memory for tpu_custom_call.1']
    #allocation4 [shape = 's32[2]{0}', space=sflag, size = 0x8, scoped, tag = 'scoped memory for tpu_custom_call.1']
    #allocation5 [shape = 'u8[16384]{0}', space=vmem, size = 0x4000, scoped, tag = 'input window, operand 1, single buffered']
    #allocation6 [shape = 's32[1]{0}', space=sflag, size = 0x4, scoped, tag = 'scoped memory for tpu_custom_call.1']
    #allocation7 [shape = 'u8[2048]{0}', space=vmem, size = 0x800, scoped, tag = 'input window, operand 2, single buffered']
    #allocation8 [shape = 'u8[8192]{0}', space=vmem, size = 0x2000, scoped, tag = 'output window, operand 0']
    %8 = vsyncpa [#allocation3], 0
    %s9 = scalar_lea.sflag [#allocation3], 1
    %10 = vsyncpa %s9, 0
    %11 = vsyncpa [#allocation6], 0
    %12 = vsyncpa [#allocation4], 0
    %s13 = scalar_lea.sflag [#allocation4], 1
    %14 = vsyncpa %s13, 0
    loop: start=0, step=1, limit=4
    $region2: #{tpu_custom_call.1} parent=1 // loop_pre_header
      _
    $region3: #{tpu_custom_call.1} parent=1 // loop_header
      %s16 = sphi 0, %s20
      %p17 = scmp.ge.s32.totalorder %s16, 4
      %s26 = sphi 0, %s28
      %s29 = sphi 0, %s26
      %s30 = sphi 0, %s29
      %s46 = sphi 0, %s30
      %s50 = sphi 0, %s50
      %s52 = sphi 0, %s50
      %s53 = sphi 0, %s52
      %s67 = sphi 0, %s53
      %s71 = sphi 0, %s71
      %s73 = sphi 0, %s71
      %s74 = sphi 0, %s73
      %s88 = sphi 0, %s74
      %s94 = sphi 0, %s96
      %s97 = sphi 0, %s94
      %s98 = sphi 0, %s97
      %s114 = sphi 0, %s98
    $region4: #{tpu_custom_call.1} parent=1 // loop_header_branch
      %19 = sbr.rel (%p17) target = $region8
    $region5: #{tpu_custom_call.1} parent=1 // loop_body
      %s21 = ssub.s32 %s16, 1
      %s22 = ssub.s32 %s16, 2
      %s23 = sadd.s32 %s16, 1
      %s24 = ssub.s32 %s16, %s23
      %p25 = scmp.eq.s32.totalorder %s24, 0
      %s27 = sadd.s32 %s26, 1
      %s28 = scalar_select %p25, %s26, %s27
      %p31 = pneg %p25
      %p32 = scmp.eq.s32.totalorder %s16, 1
      %p33 = por %p31, %p32
      %p34 = scmp.ne.s32.totalorder %s26, %s29
      %p35 = scmp.eq.s32.totalorder %s16, 0
      %p36 = por %p34, %p35
      %p37 = scmp.ne.s32.totalorder %s26, %s29
      %p38 = scmp.eq.s32.totalorder %s21, 1
      %p39 = por %p37, %p38
      %p40 = scmp.ne.s32.totalorder %s29, %s30
      %p41 = scmp.eq.s32.totalorder %s21, 0
      %p42 = por %p40, %p41
      %p43 = scmp.ne.s32.totalorder %s29, %s30
      %p44 = scmp.eq.s32.totalorder %s22, 1
      %p45 = por %p43, %p44
      %p47 = scmp.ne.s32.totalorder %s30, %s46
      %p48 = scmp.eq.s32.totalorder %s22, 0
      %p49 = por %p47, %p48
      %s51 = sadd.s32 %s50, 1
      %p54 = scmp.eq.s32.totalorder %s16, 1
      %p55 = scmp.ne.s32.totalorder %s50, %s52
      %p56 = scmp.eq.s32.totalorder %s16, 0
      %p57 = por %p55, %p56
      %p58 = scmp.ne.s32.totalorder %s50, %s52
      %p59 = scmp.eq.s32.totalorder %s21, 1
      %p60 = por %p58, %p59
      %p61 = scmp.ne.s32.totalorder %s52, %s53
      %p62 = scmp.eq.s32.totalorder %s21, 0
      %p63 = por %p61, %p62
      %p64 = scmp.ne.s32.totalorder %s52, %s53
      %p65 = scmp.eq.s32.totalorder %s22, 1
      %p66 = por %p64, %p65
      %p68 = scmp.ne.s32.totalorder %s53, %s67
      %p69 = scmp.eq.s32.totalorder %s22, 0
      %p70 = por %p68, %p69
      %s72 = sadd.s32 %s71, 1
      %p75 = scmp.eq.s32.totalorder %s16, 1
      %p76 = scmp.ne.s32.totalorder %s71, %s73
      %p77 = scmp.eq.s32.totalorder %s16, 0
      %p78 = por %p76, %p77
      %p79 = scmp.ne.s32.totalorder %s71, %s73
      %p80 = scmp.eq.s32.totalorder %s21, 1
      %p81 = por %p79, %p80
      %p82 = scmp.ne.s32.totalorder %s73, %s74
      %p83 = scmp.eq.s32.totalorder %s21, 0
      %p84 = por %p82, %p83
      %p85 = scmp.ne.s32.totalorder %s73, %s74
      %p86 = scmp.eq.s32.totalorder %s22, 1
      %p87 = por %p85, %p86
      %p89 = scmp.ne.s32.totalorder %s74, %s88
      %p90 = scmp.eq.s32.totalorder %s22, 0
      %p91 = por %p89, %p90
      %s92 = ssub.s32 %s16, %s23
      %p93 = scmp.eq.s32.totalorder %s92, 0
      %s95 = sadd.s32 %s94, 1
      %s96 = scalar_select %p93, %s94, %s95
      %p99 = pneg %p93
      %p100 = scmp.eq.s32.totalorder %s16, 1
      %p101 = por %p99, %p100
      %p102 = scmp.ne.s32.totalorder %s94, %s97
      %p103 = scmp.eq.s32.totalorder %s16, 0
      %p104 = por %p102, %p103
      %p105 = scmp.ne.s32.totalorder %s94, %s97
      %p106 = scmp.eq.s32.totalorder %s21, 1
      %p107 = por %p105, %p106
      %p108 = scmp.ne.s32.totalorder %s97, %s98
      %p109 = scmp.eq.s32.totalorder %s21, 0
      %p110 = por %p108, %p109
      %p111 = scmp.ne.s32.totalorder %s97, %s98
      %p112 = scmp.eq.s32.totalorder %s22, 1
      %p113 = por %p111, %p112
      %p115 = scmp.ne.s32.totalorder %s98, %s114
      %p116 = scmp.eq.s32.totalorder %s22, 0
      %p117 = por %p115, %p116
      %p118 = scmp.le.s32.totalorder 1, %s16
      %p119 = scmp.lt.s32.totalorder %s16, 3
      %p120 = pnand %p118, %p119
      %p121 = pneg %p120
      // Predicated region
      $region9: #{tpu_custom_call.1} parent=5 // pred_check
        _
      $region10: #{tpu_custom_call.1} parent=5 // pred_check_branch
        %123 = sbr.rel (%p120) target = $region12
      $region11: #{tpu_custom_call.1} parent=5 // pred_region
        %s124 = ssub.s32 %s16, 1
        // Predicated region
        $region13: #{tpu_custom_call.1} parent=11 // pred_check
          %p125 = pneg %p63
        $region14: #{tpu_custom_call.1} parent=11 // pred_check_branch
          %127 = sbr.rel (%p125) target = $region16
        $region15: #{tpu_custom_call.1} parent=11 // pred_region
          %129 = vsyncadd [#allocation6], 0
          %s130 = sshll.u32 %s1, 4
          %s131 = int_to_ptr.hbm [resolvable:$true] %s130
          %s132 = sshll.u32 [#allocation5], 4
          %s133 = int_to_ptr.vmem [resolvable:$true] %s132
          %138 = dma.hbm_to_vmem [thread:$0]  %s131, 512, %s133, [#allocation6], 128, 128, 8
        $region16: #{tpu_custom_call.1} parent=11 // pred_fallthru
          _
        // Predicated region
        $region17: #{tpu_custom_call.1} parent=11 // pred_check
          %p139 = pneg %p84
        $region18: #{tpu_custom_call.1} parent=11 // pred_check_branch
          %141 = sbr.rel (%p139) target = $region20
        $region19: #{tpu_custom_call.1} parent=11 // pred_region
          %143 = vsyncadd [#allocation6], 0
          %s145 = sshll.u32 %s2, 4
          %s146 = int_to_ptr.hbm [resolvable:$true] %s145
          %s147 = sshll.u32 [#allocation7], 4
          %s148 = int_to_ptr.vmem [resolvable:$true] %s147
          %150 = dma.hbm_to_vmem [thread:$0]  %s146, 64, %s148, [#allocation6]
        $region20: #{tpu_custom_call.1} parent=11 // pred_fallthru
          _
      $region12: #{tpu_custom_call.1} parent=5 // pred_fallthru
        _
      %p151 = scmp.lt.s32.totalorder %s16, 2
      // Predicated region
      $region21: #{tpu_custom_call.1} parent=5 // pred_check
        %p152 = pneg %p151
      $region22: #{tpu_custom_call.1} parent=5 // pred_check_branch
        %154 = sbr.rel (%p152) target = $region24
      $region23: #{tpu_custom_call.1} parent=5 // pred_region
        // Predicated region
        $region25: #{tpu_custom_call.1} parent=23 // pred_check
          %p155 = pneg %p36
        $region26: #{tpu_custom_call.1} parent=23 // pred_check_branch
          %157 = sbr.rel (%p155) target = $region28
        $region27: #{tpu_custom_call.1} parent=23 // pred_region
          %s158 = sand.u32 %s26, 1
          %s159 = scalar_lea.sflag [#allocation3], %s158
          %s160 = sand.u32 %s26, 1
          %s161 = smul.addr %s160, 8
          %s162 = scalar_lea.vmem [#allocation2], %s161
          %164 = vsyncadd %s159, 0
          %s165 = smul.addr %s16, 8
          %s166 = scalar_lea.hbm %s0, %s165
          %s168 = sshll.u32 %s166, 4
          %s169 = int_to_ptr.hbm [resolvable:$true] %s168
          %s170 = sshll.u32 %s162, 4
          %s171 = int_to_ptr.vmem [resolvable:$true] %s170
          %173 = dma.hbm_to_vmem [thread:$0]  %s169, 128, %s171, %s159
        $region28: #{tpu_custom_call.1} parent=23 // pred_fallthru
          _
      $region24: #{tpu_custom_call.1} parent=5 // pred_fallthru
        _
      %p174 = scmp.le.s32.totalorder 1, %s16
      %p175 = scmp.lt.s32.totalorder %s16, 3
      %p176 = pnand %p174, %p175
      %p177 = pneg %p176
      // Predicated region
      $region29: #{tpu_custom_call.1} parent=5 // pred_check
        _
      $region30: #{tpu_custom_call.1} parent=5 // pred_check_branch
        %179 = sbr.rel (%p176) target = $region32
      $region31: #{tpu_custom_call.1} parent=5 // pred_region
        %s180 = ssub.s32 %s16, 1
        %s181 = sand.u32 %s29, 1
        %s182 = scalar_lea.sflag [#allocation3], %s181
        %s183 = sand.u32 %s29, 1
        %s184 = smul.addr %s183, 8
        %s185 = scalar_lea.vmem [#allocation2], %s184
        // Predicated region
        $region33: #{tpu_custom_call.1} parent=31 // pred_check
          %p186 = pneg %p42
        $region34: #{tpu_custom_call.1} parent=31 // pred_check_branch
          %188 = sbr.rel (%p186) target = $region36
        $region35: #{tpu_custom_call.1} parent=31 // pred_region
          %190 = dma.done %s182, 128
        $region36: #{tpu_custom_call.1} parent=31 // pred_fallthru
          _
        // Predicated region
        $region37: #{tpu_custom_call.1} parent=31 // pred_check
          %p191 = pneg %p63
        $region38: #{tpu_custom_call.1} parent=31 // pred_check_branch
          %193 = sbr.rel (%p191) target = $region40
        $region39: #{tpu_custom_call.1} parent=31 // pred_region
          %195 = dma.done [#allocation6], 512
        $region40: #{tpu_custom_call.1} parent=31 // pred_fallthru
          _
        // Predicated region
        $region41: #{tpu_custom_call.1} parent=31 // pred_check
          %p196 = pneg %p84
        $region42: #{tpu_custom_call.1} parent=31 // pred_check_branch
          %198 = sbr.rel (%p196) target = $region44
        $region43: #{tpu_custom_call.1} parent=31 // pred_region
          %200 = dma.done [#allocation6], 64
        $region44: #{tpu_custom_call.1} parent=31 // pred_fallthru
          _
        %s201 = sand.u32 %s29, 1
        %s202 = scalar_lea.sflag [#allocation3], %s201
        %s203 = sand.u32 %s29, 1
        %s204 = smul.addr %s203, 8
        %s205 = scalar_lea.vmem [#allocation2], %s204
        %p206 = pneg %p42
        %p207 = pneg %p39
        %p208 = pneg %p63
        %p209 = pneg %p60
        %p210 = pneg %p84
        %p211 = pneg %p81
        %p212 = pneg %p110
        %p213 = pneg %p107
        %s214 = sand.u32 %s97, 1
        %s215 = scalar_lea.sflag [#allocation4], %s214
        %s216 = sand.u32 %s97, 1
        %s217 = smul.addr %s216, 8
        %s218 = scalar_lea.vmem [#allocation8], %s217
        %v219 = vld [vmem:[%s185] sm:$0xff]
        %v220 = vld [vmem:[#allocation5] sm:$0xff]
        %v221 = vld [vmem:[#allocation5 + $0x8] sm:$0xff]
        %v222 = vld [vmem:[#allocation5 + $0x10] sm:$0xff]
        %v223 = vld [vmem:[#allocation5 + $0x18] sm:$0xff]
        %v224 = vld [vmem:[#allocation7] sm:$0x1]
        %v225 = vld [vmem:[#allocation7 + $0x1] sm:$0x1]
        %v226 = vld [vmem:[#allocation7 + $0x2] sm:$0x1]
        %v227 = vperm.slane %v224, 0
        %vm228 = vcmask 261120
        %v230 = vsel %vm228, %v219, 0
        %232 = vmatpush.msra.mxu0 0.0
        %233 = vmatpush.msra.mxu0 0.0
        %234 = vmatpush.msra.mxu0 0.0
        %235 = vmatpush.msra.mxu0 0.0
        %236 = vmatpush.msra.mxu0 0.0
        %237 = vmatpush.msra.mxu0 0.0
        %238 = vmatpush.msra.mxu0 0.0
        %239 = vmatpush.msra.mxu0 0.0
        %240 = vmatpush.msra.mxu0 0.0
        %241 = vmatpush.msra.mxu0 0.0
        %242 = vmatpush.msra.mxu0 0.0
        %243 = vmatpush.msra.mxu0 0.0
        %244 = vmatpush.msra.mxu0 %v223
        %245 = vmatpush.msra.mxu0 %v222
        %246 = vmatpush.msra.mxu0 %v221
        %247 = vmatpush.msra.mxu0 %v220
        %248 = vmatmul.f32.gmra.mxu0 %v230
        %v249 = vpop.f32.mrf.mxu0
        %v250 = vadd.f32 %v227, %v249
        %251 = vdwg.mxu0
        %v252 = vsel %vm228, %v250, 0.0
        %253 = vadd.xlane.f32.xlu0 %v252
        %v254 = vpop.xlane.xlu0 %253
        %v255 = vmul.f32 %v254, 0.03125
        %v256 = vsub.f32 %v250, %v255
        %v257 = vmul.f32 %v256, %v256
        %v258 = vsel %vm228, %v257, 0.0
        %259 = vadd.xlane.f32.xlu0 %v258
        %v260 = vpop.xlane.xlu0 %259
        %v261 = vmul.f32 %v260, 0.03125
        %v262 = vadd.f32 %v261, 1e-05
        %v263 = vrsqrt.pop %v262
        %v264 = vmul.f32 %v263, %v262
        %v265 = vmul.f32 %v264, %v263
        %v266 = vmul.f32 0.5, %v265
        %v267 = vsub.f32 1.5, %v266
        %v268 = vmul.f32 %v263, %v267
        %vm269 = vweird.f32 %v262
        %vm270 = vweird.f32 %v263
        %vm271 = vmor %vm269, %vm270
        %v272 = vsel %vm271, %v263, %v268
        %v273 = vperm.slane %v225, 0
        %v274 = vmul.f32 %v273, %v272
        %v275 = vmul.f32 %v256, %v274
        %v276 = vperm.slane %v226, 0
        %v277 = vadd.f32 %v275, %v276
        %278 = vst.msk [vmem:[%s218] sm:$0xff] %vm228, %v277
        %s279 = sand.u32 %s97, 1
        %s280 = scalar_lea.sflag [#allocation4], %s279
        %s281 = sand.u32 %s97, 1
        %s282 = smul.addr %s281, 8
        %s283 = scalar_lea.vmem [#allocation8], %s282
        // Predicated region
        $region45: #{tpu_custom_call.1} parent=31 // pred_check
          %p284 = pneg %p107
        $region46: #{tpu_custom_call.1} parent=31 // pred_check_branch
          %286 = sbr.rel (%p284) target = $region48
        $region47: #{tpu_custom_call.1} parent=31 // pred_region
          %288 = vsyncadd %s280, 0
          %s289 = smul.addr %s21, 8
          %s290 = scalar_lea.hbm %s3, %s289
          %s292 = sshll.u32 %s283, 4
          %s293 = int_to_ptr.vmem [resolvable:$true] %s292
          %s294 = sshll.u32 %s290, 4
          %s295 = int_to_ptr.hbm [resolvable:$true] %s294
          %297 = dma.vmem_to_hbm [thread:$0]  %s293, 128, %s295, %s280
        $region48: #{tpu_custom_call.1} parent=31 // pred_fallthru
          _
      $region32: #{tpu_custom_call.1} parent=5 // pred_fallthru
        _
      %p298 = scmp.le.s32.totalorder 2, %s16
      // Predicated region
      $region49: #{tpu_custom_call.1} parent=5 // pred_check
        %p299 = pneg %p298
      $region50: #{tpu_custom_call.1} parent=5 // pred_check_branch
        %301 = sbr.rel (%p299) target = $region52
      $region51: #{tpu_custom_call.1} parent=5 // pred_region
        %s302 = ssub.s32 %s16, 2
        // Predicated region
        $region53: #{tpu_custom_call.1} parent=51 // pred_check
          %p303 = pneg %p113
        $region54: #{tpu_custom_call.1} parent=51 // pred_check_branch
          %305 = sbr.rel (%p303) target = $region56
        $region55: #{tpu_custom_call.1} parent=51 // pred_region
          %s306 = sand.u32 %s98, 1
          %s307 = scalar_lea.sflag [#allocation4], %s306
          %s308 = sand.u32 %s98, 1
          %s309 = smul.addr %s308, 8
          %s310 = scalar_lea.vmem [#allocation8], %s309
          %312 = dma.done %s307, 128
        $region56: #{tpu_custom_call.1} parent=51 // pred_fallthru
          _
      $region52: #{tpu_custom_call.1} parent=5 // pred_fallthru
        _
    $region6: #{tpu_custom_call.1} parent=1 // loop_footer
      %s20 = sadd.s32 1, %s16
    $region7: #{tpu_custom_call.1} parent=1 // loop_footer_branch
      %15 = sbr.rel target = $region3
    $region8: #{tpu_custom_call.1} parent=1 // loop_exit
      _
    %313 = vsyncpa [#allocation3], 1
    %s314 = scalar_lea.sflag [#allocation3], 1
    %315 = vsyncpa %s314, 1
    %316 = vsyncpa [#allocation6], 1
    %317 = vsyncpa [#allocation4], 1
    %s318 = scalar_lea.sflag [#allocation4], 1
    %319 = vsyncpa %s318, 1

// kernel: tpu_custom_call.1
$region0: #{tpu_custom_call.1}
  #allocation0 [shape = 'u32[]', space=smem, size = 0x4, offset = 0x4, fixed_abs, tag = 'smem constant byte address 0x4 - core index']
  #allocation1 [shape = 'u32[72,128]{1,0:T(1,128)}', space=vmem, size = 0x9000, scoped, tag = 'internal scratch']
  %s0 = inlined_call_operand.hbm [shape: f32[16,32], index: 0, kind: input, shape index: {}]
  %s1 = inlined_call_operand.hbm [shape: f32[32,32], index: 1, kind: input, shape index: {}]
  %s2 = inlined_call_operand.hbm [shape: f32[3,32], index: 2, kind: input, shape index: {}]
  %s3 = inlined_call_operand.hbm [shape: f32[16,32], index: 3, kind: output, shape index: {}]
  %s4 = sld [smem:[#allocation0]]
  $region57: #{tpu_custom_call.1} parent=0
    _
  %s6 = ssub.s32 1, %s4
  %s7 = scalar_select 0, %s6, %s4
  $region1: #{tpu_custom_call.1} parent=0
    #allocation2 [shape = 'u8[8192]{0}', space=vmem, size = 0x2000, scoped, tag = 'input window, operand 0']
    #allocation3 [shape = 's32[2]{0}', space=sflag, size = 0x8, scoped, tag = 'scoped memory for tpu_custom_call.1']
    #allocation4 [shape = 's32[2]{0}', space=sflag, size = 0x8, scoped, tag = 'scoped memory for tpu_custom_call.1']
    #allocation5 [shape = 'u8[16384]{0}', space=vmem, size = 0x4000, scoped, tag = 'input window, operand 1, single buffered']
    #allocation6 [shape = 's32[1]{0}', space=sflag, size = 0x4, scoped, tag = 'scoped memory for tpu_custom_call.1']
    #allocation7 [shape = 'u8[2048]{0}', space=vmem, size = 0x800, scoped, tag = 'input window, operand 2, single buffered']
    #allocation8 [shape = 'u8[8192]{0}', space=vmem, size = 0x2000, scoped, tag = 'output window, operand 0']
    %8 = vsyncpa [#allocation3], 0
    %s9 = scalar_lea.sflag [#allocation3], 1
    %10 = vsyncpa %s9, 0
    %11 = vsyncpa [#allocation6], 0
    %12 = vsyncpa [#allocation4], 0
    %s13 = scalar_lea.sflag [#allocation4], 1
    %14 = vsyncpa %s13, 0
    loop: start=0, step=1, limit=4
    $region2: #{tpu_custom_call.1} parent=1 // loop_pre_header
      _
    $region3: #{tpu_custom_call.1} parent=1 // loop_header
      %s16 = sphi 0, %s20
      %p17 = scmp.ge.s32.totalorder %s16, 4
      %s26 = sphi 0, %s28
      %s29 = sphi 0, %s26
      %s30 = sphi 0, %s29
      %s46 = sphi 0, %s30
      %s50 = sphi 0, %s50
      %s52 = sphi 0, %s50
      %s53 = sphi 0, %s52
      %s67 = sphi 0, %s53
      %s71 = sphi 0, %s71
      %s73 = sphi 0, %s71
      %s74 = sphi 0, %s73
      %s88 = sphi 0, %s74
      %s94 = sphi 0, %s96
      %s97 = sphi 0, %s94
      %s98 = sphi 0, %s97
      %s114 = sphi 0, %s98
    $region4: #{tpu_custom_call.1} parent=1 // loop_header_branch
      %19 = sbr.rel (%p17) target = $region8
    $region5: #{tpu_custom_call.1} parent=1 // loop_body
      %s21 = ssub.s32 %s16, 1
      %s22 = ssub.s32 %s16, 2
      %s23 = sadd.s32 %s16, 1
      %s24 = ssub.s32 %s16, %s23
      %p25 = scmp.eq.s32.totalorder %s24, 0
      %s27 = sadd.s32 %s26, 1
      %s28 = scalar_select %p25, %s26, %s27
      %p31 = pneg %p25
      %p32 = scmp.eq.s32.totalorder %s16, 1
      %p33 = por %p31, %p32
      %p34 = scmp.ne.s32.totalorder %s26, %s29
      %p35 = scmp.eq.s32.totalorder %s16, 0
      %p36 = por %p34, %p35
      %p37 = scmp.ne.s32.totalorder %s26, %s29
      %p38 = scmp.eq.s32.totalorder %s21, 1
      %p39 = por %p37, %p38
      %p40 = scmp.ne.s32.totalorder %s29, %s30
      %p41 = scmp.eq.s32.totalorder %s21, 0
      %p42 = por %p40, %p41
      %p43 = scmp.ne.s32.totalorder %s29, %s30
      %p44 = scmp.eq.s32.totalorder %s22, 1
      %p45 = por %p43, %p44
      %p47 = scmp.ne.s32.totalorder %s30, %s46
      %p48 = scmp.eq.s32.totalorder %s22, 0
      %p49 = por %p47, %p48
      %s51 = sadd.s32 %s50, 1
      %p54 = scmp.eq.s32.totalorder %s16, 1
      %p55 = scmp.ne.s32.totalorder %s50, %s52
      %p56 = scmp.eq.s32.totalorder %s16, 0
      %p57 = por %p55, %p56
      %p58 = scmp.ne.s32.totalorder %s50, %s52
      %p59 = scmp.eq.s32.totalorder %s21, 1
      %p60 = por %p58, %p59
      %p61 = scmp.ne.s32.totalorder %s52, %s53
      %p62 = scmp.eq.s32.totalorder %s21, 0
      %p63 = por %p61, %p62
      %p64 = scmp.ne.s32.totalorder %s52, %s53
      %p65 = scmp.eq.s32.totalorder %s22, 1
      %p66 = por %p64, %p65
      %p68 = scmp.ne.s32.totalorder %s53, %s67
      %p69 = scmp.eq.s32.totalorder %s22, 0
      %p70 = por %p68, %p69
      %s72 = sadd.s32 %s71, 1
      %p75 = scmp.eq.s32.totalorder %s16, 1
      %p76 = scmp.ne.s32.totalorder %s71, %s73
      %p77 = scmp.eq.s32.totalorder %s16, 0
      %p78 = por %p76, %p77
      %p79 = scmp.ne.s32.totalorder %s71, %s73
      %p80 = scmp.eq.s32.totalorder %s21, 1
      %p81 = por %p79, %p80
      %p82 = scmp.ne.s32.totalorder %s73, %s74
      %p83 = scmp.eq.s32.totalorder %s21, 0
      %p84 = por %p82, %p83
      %p85 = scmp.ne.s32.totalorder %s73, %s74
      %p86 = scmp.eq.s32.totalorder %s22, 1
      %p87 = por %p85, %p86
      %p89 = scmp.ne.s32.totalorder %s74, %s88
      %p90 = scmp.eq.s32.totalorder %s22, 0
      %p91 = por %p89, %p90
      %s92 = ssub.s32 %s16, %s23
      %p93 = scmp.eq.s32.totalorder %s92, 0
      %s95 = sadd.s32 %s94, 1
      %s96 = scalar_select %p93, %s94, %s95
      %p99 = pneg %p93
      %p100 = scmp.eq.s32.totalorder %s16, 1
      %p101 = por %p99, %p100
      %p102 = scmp.ne.s32.totalorder %s94, %s97
      %p103 = scmp.eq.s32.totalorder %s16, 0
      %p104 = por %p102, %p103
      %p105 = scmp.ne.s32.totalorder %s94, %s97
      %p106 = scmp.eq.s32.totalorder %s21, 1
      %p107 = por %p105, %p106
      %p108 = scmp.ne.s32.totalorder %s97, %s98
      %p109 = scmp.eq.s32.totalorder %s21, 0
      %p110 = por %p108, %p109
      %p111 = scmp.ne.s32.totalorder %s97, %s98
      %p112 = scmp.eq.s32.totalorder %s22, 1
      %p113 = por %p111, %p112
      %p115 = scmp.ne.s32.totalorder %s98, %s114
      %p116 = scmp.eq.s32.totalorder %s22, 0
      %p117 = por %p115, %p116
      %p118 = scmp.le.s32.totalorder 1, %s16
      %p119 = scmp.lt.s32.totalorder %s16, 3
      %p120 = pnand %p118, %p119
      %p121 = pneg %p120
      // Predicated region
      $region9: #{tpu_custom_call.1} parent=5 // pred_check
        _
      $region10: #{tpu_custom_call.1} parent=5 // pred_check_branch
        %123 = sbr.rel (%p120) target = $region12
      $region11: #{tpu_custom_call.1} parent=5 // pred_region
        %s124 = ssub.s32 %s16, 1
        // Predicated region
        $region13: #{tpu_custom_call.1} parent=11 // pred_check
          %p125 = pneg %p63
        $region14: #{tpu_custom_call.1} parent=11 // pred_check_branch
          %127 = sbr.rel (%p125) target = $region16
        $region15: #{tpu_custom_call.1} parent=11 // pred_region
          %129 = vsyncadd [#allocation6], 0
          %s130 = sshll.u32 %s1, 4
          %s131 = int_to_ptr.hbm [resolvable:$true] %s130
          %s132 = sshll.u32 [#allocation5], 4
          %s133 = int_to_ptr.vmem [resolvable:$true] %s132
          %138 = dma.hbm_to_vmem [thread:$0]  %s131, 512, %s133, [#allocation6], 128, 128, 8
        $region16: #{tpu_custom_call.1} parent=11 // pred_fallthru
          _
        // Predicated region
        $region17: #{tpu_custom_call.1} parent=11 // pred_check
          %p139 = pneg %p84
        $region18: #{tpu_custom_call.1} parent=11 // pred_check_branch
          %141 = sbr.rel (%p139) target = $region20
        $region19: #{tpu_custom_call.1} parent=11 // pred_region
          %143 = vsyncadd [#allocation6], 0
          %s145 = sshll.u32 %s2, 4
          %s146 = int_to_ptr.hbm [resolvable:$true] %s145
          %s147 = sshll.u32 [#allocation7], 4
          %s148 = int_to_ptr.vmem [resolvable:$true] %s147
          %150 = dma.hbm_to_vmem [thread:$0]  %s146, 64, %s148, [#allocation6]
        $region20: #{tpu_custom_call.1} parent=11 // pred_fallthru
          _
      $region12: #{tpu_custom_call.1} parent=5 // pred_fallthru
        _
      %p151 = scmp.lt.s32.totalorder %s16, 2
      // Predicated region
      $region21: #{tpu_custom_call.1} parent=5 // pred_check
        %p152 = pneg %p151
      $region22: #{tpu_custom_call.1} parent=5 // pred_check_branch
        %154 = sbr.rel (%p152) target = $region24
      $region23: #{tpu_custom_call.1} parent=5 // pred_region
        // Predicated region
        $region25: #{tpu_custom_call.1} parent=23 // pred_check
          %p155 = pneg %p36
        $region26: #{tpu_custom_call.1} parent=23 // pred_check_branch
          %157 = sbr.rel (%p155) target = $region28
        $region27: #{tpu_custom_call.1} parent=23 // pred_region
          %s158 = sand.u32 %s26, 1
          %s159 = scalar_lea.sflag [#allocation3], %s158
          %s160 = sand.u32 %s26, 1
          %s161 = smul.addr %s160, 8
          %s162 = scalar_lea.vmem [#allocation2], %s161
          %164 = vsyncadd %s159, 0
          %s165 = smul.addr %s16, 8
          %s166 = scalar_lea.hbm %s0, %s165
          %s168 = sshll.u32 %s166, 4
          %s169 = int_to_ptr.hbm [resolvable:$true] %s168
          %s170 = sshll.u32 %s162, 4
          %s171 = int_to_ptr.vmem [resolvable:$true] %s170
          %173 = dma.hbm_to_vmem [thread:$0]  %s169, 128, %s171, %s159
        $region28: #{tpu_custom_call.1} parent=23 // pred_fallthru
          _
      $region24: #{tpu_custom_call.1} parent=5 // pred_fallthru
        _
      %p174 = scmp.le.s32.totalorder 1, %s16
      %p175 = scmp.lt.s32.totalorder %s16, 3
      %p176 = pnand %p174, %p175
      %p177 = pneg %p176
      // Predicated region
      $region29: #{tpu_custom_call.1} parent=5 // pred_check
        _
      $region30: #{tpu_custom_call.1} parent=5 // pred_check_branch
        %179 = sbr.rel (%p176) target = $region32
      $region31: #{tpu_custom_call.1} parent=5 // pred_region
        %s180 = ssub.s32 %s16, 1
        %s181 = sand.u32 %s29, 1
        %s182 = scalar_lea.sflag [#allocation3], %s181
        %s183 = sand.u32 %s29, 1
        %s184 = smul.addr %s183, 8
        %s185 = scalar_lea.vmem [#allocation2], %s184
        // Predicated region
        $region33: #{tpu_custom_call.1} parent=31 // pred_check
          %p186 = pneg %p42
        $region34: #{tpu_custom_call.1} parent=31 // pred_check_branch
          %188 = sbr.rel (%p186) target = $region36
        $region35: #{tpu_custom_call.1} parent=31 // pred_region
          %190 = dma.done %s182, 128
        $region36: #{tpu_custom_call.1} parent=31 // pred_fallthru
          _
        // Predicated region
        $region37: #{tpu_custom_call.1} parent=31 // pred_check
          %p191 = pneg %p63
        $region38: #{tpu_custom_call.1} parent=31 // pred_check_branch
          %193 = sbr.rel (%p191) target = $region40
        $region39: #{tpu_custom_call.1} parent=31 // pred_region
          %195 = dma.done [#allocation6], 512
        $region40: #{tpu_custom_call.1} parent=31 // pred_fallthru
          _
        // Predicated region
        $region41: #{tpu_custom_call.1} parent=31 // pred_check
          %p196 = pneg %p84
        $region42: #{tpu_custom_call.1} parent=31 // pred_check_branch
          %198 = sbr.rel (%p196) target = $region44
        $region43: #{tpu_custom_call.1} parent=31 // pred_region
          %200 = dma.done [#allocation6], 64
        $region44: #{tpu_custom_call.1} parent=31 // pred_fallthru
          _
        %s201 = sand.u32 %s29, 1
        %s202 = scalar_lea.sflag [#allocation3], %s201
        %s203 = sand.u32 %s29, 1
        %s204 = smul.addr %s203, 8
        %s205 = scalar_lea.vmem [#allocation2], %s204
        %p206 = pneg %p42
        %p207 = pneg %p39
        %p208 = pneg %p63
        %p209 = pneg %p60
        %p210 = pneg %p84
        %p211 = pneg %p81
        %p212 = pneg %p110
        %p213 = pneg %p107
        %s214 = sand.u32 %s97, 1
        %s215 = scalar_lea.sflag [#allocation4], %s214
        %s216 = sand.u32 %s97, 1
        %s217 = smul.addr %s216, 8
        %s218 = scalar_lea.vmem [#allocation8], %s217
        %v219 = vld [vmem:[%s185] sm:$0xff]
        %v220 = vld [vmem:[#allocation5] sm:$0xff]
        %v221 = vld [vmem:[#allocation5 + $0x8] sm:$0xff]
        %v222 = vld [vmem:[#allocation5 + $0x10] sm:$0xff]
        %v223 = vld [vmem:[#allocation5 + $0x18] sm:$0xff]
        %v224 = vld [vmem:[#allocation7] sm:$0x1]
        %v225 = vld [vmem:[#allocation7 + $0x1] sm:$0x1]
        %v226 = vld [vmem:[#allocation7 + $0x2] sm:$0x1]
        %v227 = vperm.slane %v224, 0
        %vm228 = vcmask 261120
        %v230 = vsel %vm228, %v219, 0
        %232 = vmatpush.msra.mxu0 0.0
        %233 = vmatpush.msra.mxu0 0.0
        %234 = vmatpush.msra.mxu0 0.0
        %235 = vmatpush.msra.mxu0 0.0
        %236 = vmatpush.msra.mxu0 0.0
        %237 = vmatpush.msra.mxu0 0.0
        %238 = vmatpush.msra.mxu0 0.0
        %239 = vmatpush.msra.mxu0 0.0
        %240 = vmatpush.msra.mxu0 0.0
        %241 = vmatpush.msra.mxu0 0.0
        %242 = vmatpush.msra.mxu0 0.0
        %243 = vmatpush.msra.mxu0 0.0
        %244 = vmatpush.msra.mxu0 %v223
        %245 = vmatpush.msra.mxu0 %v222
        %246 = vmatpush.msra.mxu0 %v221
        %247 = vmatpush.msra.mxu0 %v220
        %248 = vmatmul.f32.gmra.mxu0 %v230
        %v249 = vpop.f32.mrf.mxu0
        %v250 = vadd.f32 %v227, %v249
        %251 = vdwg.mxu0
        %v252 = vsel %vm228, %v250, 0.0
        %253 = vadd.xlane.f32.xlu0 %v252
        %v254 = vpop.xlane.xlu0 %253
        %v255 = vmul.f32 %v254, 0.03125
        %v256 = vsub.f32 %v250, %v255
        %v257 = vmul.f32 %v256, %v256
        %v258 = vsel %vm228, %v257, 0.0
        %259 = vadd.xlane.f32.xlu0 %v258
        %v260 = vpop.xlane.xlu0 %259
        %v261 = vmul.f32 %v260, 0.03125
        %v262 = vadd.f32 %v261, 1e-05
        %v263 = vrsqrt.pop %v262
        %v264 = vmul.f32 %v263, %v262
        %v265 = vmul.f32 %v264, %v263
        %v266 = vmul.f32 0.5, %v265
        %v267 = vsub.f32 1.5, %v266
        %v268 = vmul.f32 %v263, %v267
        %vm269 = vweird.f32 %v262
        %vm270 = vweird.f32 %v263
        %vm271 = vmor %vm269, %vm270
        %v272 = vsel %vm271, %v263, %v268
        %v273 = vperm.slane %v225, 0
        %v274 = vmul.f32 %v273, %v272
        %v275 = vmul.f32 %v256, %v274
        %v276 = vperm.slane %v226, 0
        %v277 = vadd.f32 %v275, %v276
        %278 = vst.msk [vmem:[%s218] sm:$0xff] %vm228, %v277
        %s279 = sand.u32 %s97, 1
        %s280 = scalar_lea.sflag [#allocation4], %s279
        %s281 = sand.u32 %s97, 1
        %s282 = smul.addr %s281, 8
        %s283 = scalar_lea.vmem [#allocation8], %s282
        // Predicated region
        $region45: #{tpu_custom_call.1} parent=31 // pred_check
          %p284 = pneg %p107
        $region46: #{tpu_custom_call.1} parent=31 // pred_check_branch
          %286 = sbr.rel (%p284) target = $region48
        $region47: #{tpu_custom_call.1} parent=31 // pred_region
          %288 = vsyncadd %s280, 0
          %s289 = smul.addr %s21, 8
          %s290 = scalar_lea.hbm %s3, %s289
          %s292 = sshll.u32 %s283, 4
          %s293 = int_to_ptr.vmem [resolvable:$true] %s292
          %s294 = sshll.u32 %s290, 4
          %s295 = int_to_ptr.hbm [resolvable:$true] %s294
          %297 = dma.vmem_to_hbm [thread:$0]  %s293, 128, %s295, %s280
        $region48: #{tpu_custom_call.1} parent=31 // pred_fallthru
          _
      $region32: #{tpu_custom_call.1} parent=5 // pred_fallthru
        _
      %p298 = scmp.le.s32.totalorder 2, %s16
      // Predicated region
      $region49: #{tpu_custom_call.1} parent=5 // pred_check
        %p299 = pneg %p298
      $region50: #{tpu_custom_call.1} parent=5 // pred_check_branch
        %301 = sbr.rel (%p299) target = $region52
      $region51: #{tpu_custom_call.1} parent=5 // pred_region
        %s302 = ssub.s32 %s16, 2
        // Predicated region
        $region53: #{tpu_custom_call.1} parent=51 // pred_check
          %p303 = pneg %p113
        $region54: #{tpu_custom_call.1} parent=51 // pred_check_branch
          %305 = sbr.rel (%p303) target = $region56
        $region55: #{tpu_custom_call.1} parent=51 // pred_region
          %s306 = sand.u32 %s98, 1
          %s307 = scalar_lea.sflag [#allocation4], %s306
          %s308 = sand.u32 %s98, 1
          %s309 = smul.addr %s308, 8
          %s310 = scalar_lea.vmem [#allocation8], %s309
          %312 = dma.done %s307, 128
        $region56: #{tpu_custom_call.1} parent=51 // pred_fallthru
          _
      $region52: #{tpu_custom_call.1} parent=5 // pred_fallthru
        _
    $region6: #{tpu_custom_call.1} parent=1 // loop_footer
      %s20 = sadd.s32 1, %s16
    $region7: #{tpu_custom_call.1} parent=1 // loop_footer_branch
      %15 = sbr.rel target = $region3
    $region8: #{tpu_custom_call.1} parent=1 // loop_exit
      _
    %313 = vsyncpa [#allocation3], 1
    %s314 = scalar_lea.sflag [#allocation3], 1
    %315 = vsyncpa %s314, 1
    %316 = vsyncpa [#allocation6], 1
    %317 = vsyncpa [#allocation4], 1
    %s318 = scalar_lea.sflag [#allocation4], 1
    %319 = vsyncpa %s318, 1

</llo_original>
